<compile_context>
chip_gen: v7x
topology: tpu7x:2x2x1
jax: 0.10.0
libtpu: 0.0.40
codegen_flags: <defaults>
</compile_context>

<pallas_src>
import functools

import jax
import jax.numpy as jnp
from jax.experimental import pallas as pl
from jax.experimental.pallas import tpu as pltpu

BN_EPS = 1e-5
LANE = 128
SUBLANE = 8


def _round_up(n, m):
    return (n + m - 1) // m * m


# ---------------- fused Pallas kernel ----------------

def _fused_mlp_kernel(x_ref, *refs, num_hidden, n_real):
    # refs = [w_i, gamma_i, beta_i] * num_hidden, w_last, b_last, o_ref
    o_ref = refs[-1]
    w_last_ref = refs[3 * num_hidden]
    b_last_ref = refs[3 * num_hidden + 1]

    h = x_ref[...]
    n_pad = h.shape[0]

    # Row mask so BatchNorm statistics only use the real batch rows.
    row_ids = jax.lax.broadcasted_iota(jnp.int32, (n_pad, 1), 0)
    row_mask = row_ids < n_real
    inv_n = 1.0 / float(n_real)

    for i in range(num_hidden):
        w = refs[3 * i][...]
        gamma = refs[3 * i + 1][...]
        beta = refs[3 * i + 2][...]

        # Linear (hidden bias omitted: exactly cancelled by BN's mean subtraction).
        z = jnp.dot(h, w, preferred_element_type=jnp.float32)

        # BatchNorm1d, training mode: biased batch statistics over real rows only.
        zm = jnp.where(row_mask, z, 0.0)
        mean = jnp.sum(zm, axis=0, keepdims=True) * inv_n
        centered = z - mean                          # reused for var AND normalize
        cm = jnp.where(row_mask, centered, 0.0)
        var = jnp.sum(cm * cm, axis=0, keepdims=True) * inv_n
        zn = centered * jax.lax.rsqrt(var + BN_EPS) * gamma + beta

        h = jnp.tanh(zn)
        # dropout p=0.0 -> identity

    out = jnp.dot(h, w_last_ref[...], preferred_element_type=jnp.float32) + b_last_ref[...]
    o_ref[...] = out.astype(o_ref.dtype)


# ---------------- wrapper ----------------

def _full_spec(shape):
    nd = len(shape)
    return pl.BlockSpec(shape, lambda *_: (0,) * nd)


def mlp_forward(params, x):
    """Runs the whole MLP in a single fused pallas_call and returns [N, out_channels]."""
    N, Fin = x.shape
    num_layers = len(params)
    num_hidden = num_layers - 1
    hidden = params[0]["w"].shape[1]
    out_c = params[-1]["w"].shape[1]

    n_pad = _round_up(N, SUBLANE)
    fin_pad = _round_up(Fin, LANE)
    hid_pad = _round_up(hidden, LANE)
    out_pad = _round_up(out_c, LANE)

    # Zero-pad everything to lane-dense shapes (numerically exact, see header).
    x_p = jnp.zeros((n_pad, fin_pad), jnp.float32).at[:N, :Fin].set(x)

    kernel_inputs = [x_p]
    in_specs = [_full_spec(x_p.shape)]

    for i in range(num_hidden):
        cin = Fin if i == 0 else hidden
        cin_pad = fin_pad if i == 0 else hid_pad
        w_p = jnp.zeros((cin_pad, hid_pad), jnp.float32).at[:cin, :hidden].set(params[i]["w"])
        g_p = jnp.ones((1, hid_pad), jnp.float32).at[:, :hidden].set(params[i]["gamma"])
        b_p = jnp.zeros((1, hid_pad), jnp.float32).at[:, :hidden].set(params[i]["beta"])
        kernel_inputs += [w_p, g_p, b_p]
        in_specs += [_full_spec(w_p.shape), _full_spec(g_p.shape), _full_spec(b_p.shape)]

    w_last_p = jnp.zeros((hid_pad, out_pad), jnp.float32).at[:hidden, :out_c].set(params[-1]["w"])
    b_last_p = jnp.zeros((1, out_pad), jnp.float32).at[:, :out_c].set(params[-1]["b"])
    kernel_inputs += [w_last_p, b_last_p]
    in_specs += [_full_spec(w_last_p.shape), _full_spec(b_last_p.shape)]

    kernel = functools.partial(_fused_mlp_kernel, num_hidden=num_hidden, n_real=N)

    out_p = pl.pallas_call(
        kernel,
        out_shape=jax.ShapeDtypeStruct((n_pad, out_pad), jnp.float32),
        grid=(1,),
        in_specs=in_specs,
        out_specs=_full_spec((n_pad, out_pad)),
        compiler_params=pltpu.CompilerParams(dimension_semantics=("arbitrary",)),
    )(*kernel_inputs)

    return out_p[:N, :out_c]


# ---------------- parameter init (PyTorch-style Linear init) ----------------

def init_mlp_params(key, in_channels, hidden_channels, out_channels, num_layers):
    dims = [in_channels] + [hidden_channels] * (num_layers - 1) + [out_channels]
    params = []
    for i in range(num_layers):
        fan_in, fan_out = dims[i], dims[i + 1]
        key, kw, kb = jax.random.split(key, 3)
        bound = 1.0 / jnp.sqrt(fan_in)
        # Stored already transposed: [Cin, Cout]
        w = jax.random.uniform(kw, (fan_in, fan_out), jnp.float32, -bound, bound)
        b = jax.random.uniform(kb, (1, fan_out), jnp.float32, -bound, bound)
        layer = {"w": w, "b": b}
        if i < num_layers - 1:  # hidden layers have a BatchNorm1d
            layer["gamma"] = jnp.ones((1, fan_out), jnp.float32)
            layer["beta"] = jnp.zeros((1, fan_out), jnp.float32)
        params.append(layer)
    return params


# ---------------- pure-JAX reference (keeps hidden bias; proves bias-drop is exact) ----------------

def mlp_reference(params, x):
    for layer in params[:-1]:
        h = x @ layer["w"] + layer["b"]
        mean = jnp.mean(h, axis=0, keepdims=True)
        var = jnp.mean((h - mean) ** 2, axis=0, keepdims=True)
        h = (h - mean) * jax.lax.rsqrt(var + BN_EPS)
        h = h * layer["gamma"] + layer["beta"]
        x = jnp.tanh(h)
    last = params[-1]
    return x @ last["w"] + last["b"]


if __name__ == "__main__":
    key = jax.random.PRNGKey(0)
    k_param, k_x = jax.random.split(key)

    # small SIGN-MLP config
    in_channels, hidden_channels, out_channels, num_layers = 16, 32, 8, 3
    batch = 8

    params = init_mlp_params(k_param, in_channels, hidden_channels, out_channels, num_layers)
    x = jax.random.normal(k_x, (batch, in_channels), jnp.float32)

    out = mlp_forward(params, x)
    out = jax.block_until_ready(out)

    ref = mlp_reference(params, x)
    assert out.shape == (batch, out_channels)
    assert jnp.allclose(out, ref, atol=1e-4, rtol=1e-4), "mismatch vs reference"

    print("KERNEL_OK")
</pallas_src>

<mosaic_0001>
module attributes {stable_mosaic.version = 11 : i64} {
  func.func @_fused_mlp_kernel(%arg0: i32, %arg1: memref<8x128xf32, #tpu.memory_space<vmem>>, %arg2: memref<128x128xf32, #tpu.memory_space<vmem>>, %arg3: memref<1x128xf32, #tpu.memory_space<vmem>>, %arg4: memref<1x128xf32, #tpu.memory_space<vmem>>, %arg5: memref<128x128xf32, #tpu.memory_space<vmem>>, %arg6: memref<1x128xf32, #tpu.memory_space<vmem>>, %arg7: memref<1x128xf32, #tpu.memory_space<vmem>>, %arg8: memref<128x128xf32, #tpu.memory_space<vmem>>, %arg9: memref<1x128xf32, #tpu.memory_space<vmem>>, %arg10: memref<8x128xf32, #tpu.memory_space<vmem>>) attributes {dimension_semantics = [#tpu.dimension_semantics<arbitrary>], iteration_bounds = array<i64: 1>, scalar_prefetch = 0 : i64, scratch_operands = 0 : i64, tpu.core_type = #tpu.core_type<tc>, window_params = [{pipeline_mode = #tpu.pipeline_mode<synchronous>, transform_indices = @transform_0, window_bounds = array<i64: 8, 128>}, {pipeline_mode = #tpu.pipeline_mode<synchronous>, transform_indices = @transform_1, window_bounds = array<i64: 128, 128>}, {pipeline_mode = #tpu.pipeline_mode<synchronous>, transform_indices = @transform_2, window_bounds = array<i64: 1, 128>}, {pipeline_mode = #tpu.pipeline_mode<synchronous>, transform_indices = @transform_3, window_bounds = array<i64: 1, 128>}, {pipeline_mode = #tpu.pipeline_mode<synchronous>, transform_indices = @transform_4, window_bounds = array<i64: 128, 128>}, {pipeline_mode = #tpu.pipeline_mode<synchronous>, transform_indices = @transform_5, window_bounds = array<i64: 1, 128>}, {pipeline_mode = #tpu.pipeline_mode<synchronous>, transform_indices = @transform_6, window_bounds = array<i64: 1, 128>}, {pipeline_mode = #tpu.pipeline_mode<synchronous>, transform_indices = @transform_7, window_bounds = array<i64: 128, 128>}, {pipeline_mode = #tpu.pipeline_mode<synchronous>, transform_indices = @transform_8, window_bounds = array<i64: 1, 128>}, {pipeline_mode = #tpu.pipeline_mode<synchronous>, transform_indices = @transform_9, window_bounds = array<i64: 8, 128>}]} {
    %c0 = arith.constant 0 : index
    %c0_0 = arith.constant 0 : index
    %0 = vector.load %arg1[%c0, %c0_0] : memref<8x128xf32, #tpu.memory_space<vmem>>, vector<8x128xf32>
    %1 = tpu.iota {dimensions = array<i32: 0>} : vector<8x1xi32>
    %c8_i32 = arith.constant 8 : i32
    %2 = vector.broadcast %c8_i32 : i32 to vector<8x1xi32>
    %3 = arith.cmpi slt, %1, %2 : vector<8x1xi32>
    %c0_1 = arith.constant 0 : index
    %c0_2 = arith.constant 0 : index
    %4 = vector.load %arg2[%c0_1, %c0_2] : memref<128x128xf32, #tpu.memory_space<vmem>>, vector<128x128xf32>
    %c0_3 = arith.constant 0 : index
    %c0_4 = arith.constant 0 : index
    %5 = vector.load %arg3[%c0_3, %c0_4] : memref<1x128xf32, #tpu.memory_space<vmem>>, vector<1x128xf32>
    %c0_5 = arith.constant 0 : index
    %c0_6 = arith.constant 0 : index
    %6 = vector.load %arg4[%c0_5, %c0_6] : memref<1x128xf32, #tpu.memory_space<vmem>>, vector<1x128xf32>
    %cst = arith.constant dense<0.000000e+00> : vector<8x128xf32>
    %7 = tpu.matmul %0, %4, %cst {dimension_numbers = #tpu.dot_dimension_numbers<[1], [0], [0], [1], [0, 0, 1, 1], [], []>} : vector<8x128xf32>, vector<128x128xf32>, vector<8x128xf32> -> vector<8x128xf32>
    %cst_7 = arith.constant 0.000000e+00 : f32
    %8 = vector.shape_cast %3 : vector<8x1xi1> to vector<8x1xi1>
    %9 = vector.broadcast %8 : vector<8x1xi1> to vector<8x128xi1>
    %10 = vector.broadcast %cst_7 : f32 to vector<8x128xf32>
    %11 = arith.select %9, %7, %10 : vector<8x128xi1>, vector<8x128xf32>
    %cst_8 = arith.constant dense<0.000000e+00> : vector<128xf32>
    %12 = vector.multi_reduction <add>, %11, %cst_8 [0] : vector<8x128xf32> to vector<128xf32>
    %13 = vector.shape_cast %12 : vector<128xf32> to vector<1x128xf32>
    %cst_9 = arith.constant 1.250000e-01 : f32
    %14 = vector.broadcast %cst_9 : f32 to vector<1x128xf32>
    %15 = arith.mulf %13, %14 : vector<1x128xf32>
    %16 = vector.broadcast %15 : vector<1x128xf32> to vector<8x128xf32>
    %17 = arith.subf %7, %16 : vector<8x128xf32>
    %cst_10 = arith.constant 0.000000e+00 : f32
    %18 = vector.shape_cast %3 : vector<8x1xi1> to vector<8x1xi1>
    %19 = vector.broadcast %18 : vector<8x1xi1> to vector<8x128xi1>
    %20 = vector.broadcast %cst_10 : f32 to vector<8x128xf32>
    %21 = arith.select %19, %17, %20 : vector<8x128xi1>, vector<8x128xf32>
    %22 = arith.mulf %21, %21 : vector<8x128xf32>
    %cst_11 = arith.constant dense<0.000000e+00> : vector<128xf32>
    %23 = vector.multi_reduction <add>, %22, %cst_11 [0] : vector<8x128xf32> to vector<128xf32>
    %24 = vector.shape_cast %23 : vector<128xf32> to vector<1x128xf32>
    %cst_12 = arith.constant 1.250000e-01 : f32
    %25 = vector.broadcast %cst_12 : f32 to vector<1x128xf32>
    %26 = arith.mulf %24, %25 : vector<1x128xf32>
    %cst_13 = arith.constant 9.99999974E-6 : f32
    %27 = vector.broadcast %cst_13 : f32 to vector<1x128xf32>
    %28 = arith.addf %26, %27 : vector<1x128xf32>
    %29 = math.rsqrt %28 : vector<1x128xf32>
    %30 = vector.broadcast %29 : vector<1x128xf32> to vector<8x128xf32>
    %31 = arith.mulf %17, %30 : vector<8x128xf32>
    %32 = vector.broadcast %5 : vector<1x128xf32> to vector<8x128xf32>
    %33 = arith.mulf %31, %32 : vector<8x128xf32>
    %34 = vector.broadcast %6 : vector<1x128xf32> to vector<8x128xf32>
    %35 = arith.addf %33, %34 : vector<8x128xf32>
    %36 = math.tanh %35 : vector<8x128xf32>
    %c0_14 = arith.constant 0 : index
    %c0_15 = arith.constant 0 : index
    %37 = vector.load %arg5[%c0_14, %c0_15] : memref<128x128xf32, #tpu.memory_space<vmem>>, vector<128x128xf32>
    %c0_16 = arith.constant 0 : index
    %c0_17 = arith.constant 0 : index
    %38 = vector.load %arg6[%c0_16, %c0_17] : memref<1x128xf32, #tpu.memory_space<vmem>>, vector<1x128xf32>
    %c0_18 = arith.constant 0 : index
    %c0_19 = arith.constant 0 : index
    %39 = vector.load %arg7[%c0_18, %c0_19] : memref<1x128xf32, #tpu.memory_space<vmem>>, vector<1x128xf32>
    %cst_20 = arith.constant dense<0.000000e+00> : vector<8x128xf32>
    %40 = tpu.matmul %36, %37, %cst_20 {dimension_numbers = #tpu.dot_dimension_numbers<[1], [0], [0], [1], [0, 0, 1, 1], [], []>} : vector<8x128xf32>, vector<128x128xf32>, vector<8x128xf32> -> vector<8x128xf32>
    %cst_21 = arith.constant 0.000000e+00 : f32
    %41 = vector.shape_cast %3 : vector<8x1xi1> to vector<8x1xi1>
    %42 = vector.broadcast %41 : vector<8x1xi1> to vector<8x128xi1>
    %43 = vector.broadcast %cst_21 : f32 to vector<8x128xf32>
    %44 = arith.select %42, %40, %43 : vector<8x128xi1>, vector<8x128xf32>
    %cst_22 = arith.constant dense<0.000000e+00> : vector<128xf32>
    %45 = vector.multi_reduction <add>, %44, %cst_22 [0] : vector<8x128xf32> to vector<128xf32>
    %46 = vector.shape_cast %45 : vector<128xf32> to vector<1x128xf32>
    %cst_23 = arith.constant 1.250000e-01 : f32
    %47 = vector.broadcast %cst_23 : f32 to vector<1x128xf32>
    %48 = arith.mulf %46, %47 : vector<1x128xf32>
    %49 = vector.broadcast %48 : vector<1x128xf32> to vector<8x128xf32>
    %50 = arith.subf %40, %49 : vector<8x128xf32>
    %cst_24 = arith.constant 0.000000e+00 : f32
    %51 = vector.shape_cast %3 : vector<8x1xi1> to vector<8x1xi1>
    %52 = vector.broadcast %51 : vector<8x1xi1> to vector<8x128xi1>
    %53 = vector.broadcast %cst_24 : f32 to vector<8x128xf32>
    %54 = arith.select %52, %50, %53 : vector<8x128xi1>, vector<8x128xf32>
    %55 = arith.mulf %54, %54 : vector<8x128xf32>
    %cst_25 = arith.constant dense<0.000000e+00> : vector<128xf32>
    %56 = vector.multi_reduction <add>, %55, %cst_25 [0] : vector<8x128xf32> to vector<128xf32>
    %57 = vector.shape_cast %56 : vector<128xf32> to vector<1x128xf32>
    %cst_26 = arith.constant 1.250000e-01 : f32
    %58 = vector.broadcast %cst_26 : f32 to vector<1x128xf32>
    %59 = arith.mulf %57, %58 : vector<1x128xf32>
    %cst_27 = arith.constant 9.99999974E-6 : f32
    %60 = vector.broadcast %cst_27 : f32 to vector<1x128xf32>
    %61 = arith.addf %59, %60 : vector<1x128xf32>
    %62 = math.rsqrt %61 : vector<1x128xf32>
    %63 = vector.broadcast %62 : vector<1x128xf32> to vector<8x128xf32>
    %64 = arith.mulf %50, %63 : vector<8x128xf32>
    %65 = vector.broadcast %38 : vector<1x128xf32> to vector<8x128xf32>
    %66 = arith.mulf %64, %65 : vector<8x128xf32>
    %67 = vector.broadcast %39 : vector<1x128xf32> to vector<8x128xf32>
    %68 = arith.addf %66, %67 : vector<8x128xf32>
    %69 = math.tanh %68 : vector<8x128xf32>
    %c0_28 = arith.constant 0 : index
    %c0_29 = arith.constant 0 : index
    %70 = vector.load %arg8[%c0_28, %c0_29] : memref<128x128xf32, #tpu.memory_space<vmem>>, vector<128x128xf32>
    %cst_30 = arith.constant dense<0.000000e+00> : vector<8x128xf32>
    %71 = tpu.matmul %69, %70, %cst_30 {dimension_numbers = #tpu.dot_dimension_numbers<[1], [0], [0], [1], [0, 0, 1, 1], [], []>} : vector<8x128xf32>, vector<128x128xf32>, vector<8x128xf32> -> vector<8x128xf32>
    %c0_31 = arith.constant 0 : index
    %c0_32 = arith.constant 0 : index
    %72 = vector.load %arg9[%c0_31, %c0_32] : memref<1x128xf32, #tpu.memory_space<vmem>>, vector<1x128xf32>
    %73 = vector.broadcast %72 : vector<1x128xf32> to vector<8x128xf32>
    %74 = arith.addf %71, %73 : vector<8x128xf32>
    %c0_33 = arith.constant 0 : index
    %c0_34 = arith.constant 0 : index
    %75 = vector.load %arg10[%c0_33, %c0_34] : memref<8x128xf32, #tpu.memory_space<vmem>>, vector<8x128xf32>
    tpu.vector_store %arg10[%c0_33, %c0_34], %74 {strides = array<i32>} : memref<8x128xf32, #tpu.memory_space<vmem>>, vector<8x128xf32>,
    return
  }
  func.func @transform_0(%arg0: i32) -> (i32, i32) {
    %c0_i32 = arith.constant 0 : i32
    %c0_i32_0 = arith.constant 0 : i32
    %c0_i32_1 = arith.constant 0 : i32
    return %c0_i32, %c0_i32_0 : i32, i32
  }
  func.func @transform_1(%arg0: i32) -> (i32, i32) {
    %c0_i32 = arith.constant 0 : i32
    %c0_i32_0 = arith.constant 0 : i32
    %c0_i32_1 = arith.constant 0 : i32
    return %c0_i32, %c0_i32_0 : i32, i32
  }
  func.func @transform_2(%arg0: i32) -> (i32, i32) {
    %c0_i32 = arith.constant 0 : i32
    %c0_i32_0 = arith.constant 0 : i32
    %c0_i32_1 = arith.constant 0 : i32
    return %c0_i32, %c0_i32_0 : i32, i32
  }
  func.func @transform_3(%arg0: i32) -> (i32, i32) {
    %c0_i32 = arith.constant 0 : i32
    %c0_i32_0 = arith.constant 0 : i32
    %c0_i32_1 = arith.constant 0 : i32
    return %c0_i32, %c0_i32_0 : i32, i32
  }
  func.func @transform_4(%arg0: i32) -> (i32, i32) {
    %c0_i32 = arith.constant 0 : i32
    %c0_i32_0 = arith.constant 0 : i32
    %c0_i32_1 = arith.constant 0 : i32
    return %c0_i32, %c0_i32_0 : i32, i32
  }
  func.func @transform_5(%arg0: i32) -> (i32, i32) {
    %c0_i32 = arith.constant 0 : i32
    %c0_i32_0 = arith.constant 0 : i32
    %c0_i32_1 = arith.constant 0 : i32
    return %c0_i32, %c0_i32_0 : i32, i32
  }
  func.func @transform_6(%arg0: i32) -> (i32, i32) {
    %c0_i32 = arith.constant 0 : i32
    %c0_i32_0 = arith.constant 0 : i32
    %c0_i32_1 = arith.constant 0 : i32
    return %c0_i32, %c0_i32_0 : i32, i32
  }
  func.func @transform_7(%arg0: i32) -> (i32, i32) {
    %c0_i32 = arith.constant 0 : i32
    %c0_i32_0 = arith.constant 0 : i32
    %c0_i32_1 = arith.constant 0 : i32
    return %c0_i32, %c0_i32_0 : i32, i32
  }
  func.func @transform_8(%arg0: i32) -> (i32, i32) {
    %c0_i32 = arith.constant 0 : i32
    %c0_i32_0 = arith.constant 0 : i32
    %c0_i32_1 = arith.constant 0 : i32
    return %c0_i32, %c0_i32_0 : i32, i32
  }
  func.func @transform_9(%arg0: i32) -> (i32, i32) {
    %c0_i32 = arith.constant 0 : i32
    %c0_i32_0 = arith.constant 0 : i32
    %c0_i32_1 = arith.constant 0 : i32
    return %c0_i32, %c0_i32_0 : i32, i32
  }
}

</mosaic_0001>

<llo_original>
// kernel: tpu_custom_call.1
$region0: #{tpu_custom_call.1}
  #allocation0 [shape = 'u32[]', space=smem, size = 0x4, offset = 0x4, fixed_abs, tag = 'smem constant byte address 0x4 - core index']
  #allocation1 [shape = 'u32[144,128]{1,0:T(1,128)}', space=vmem, size = 0x12000, scoped, tag = 'internal scratch']
  %s0 = inlined_call_operand.hbm [shape: f32[8,128], index: 0, kind: input, shape index: {}]
  %s1 = inlined_call_operand.hbm [shape: f32[128,128], index: 1, kind: input, shape index: {}]
  %s2 = inlined_call_operand.vmem [shape: f32[1,128], index: 2, kind: input, shape index: {}]
  %s3 = inlined_call_operand.vmem [shape: f32[1,128], index: 3, kind: input, shape index: {}]
  %s4 = inlined_call_operand.hbm [shape: f32[128,128], index: 4, kind: input, shape index: {}]
  %s5 = inlined_call_operand.vmem [shape: f32[1,128], index: 5, kind: input, shape index: {}]
  %s6 = inlined_call_operand.vmem [shape: f32[1,128], index: 6, kind: input, shape index: {}]
  %s7 = inlined_call_operand.hbm [shape: f32[128,128], index: 7, kind: input, shape index: {}]
  %s8 = inlined_call_operand.vmem [shape: f32[1,128], index: 8, kind: input, shape index: {}]
  %s9 = inlined_call_operand.hbm [shape: f32[8,128], index: 9, kind: output, shape index: {}]
  %s10 = sld [smem:[#allocation0]]
  $region62: #{tpu_custom_call.1} parent=0
    _
  %s12 = ssub.s32 1, %s10
  %s13 = scalar_select 0, %s12, %s10
  $region1: #{tpu_custom_call.1} parent=0
    #allocation2 [shape = 'u8[4096]{0}', space=vmem, size = 0x1000, scoped, tag = 'input window, operand 0, single buffered']
    #allocation3 [shape = 's32[1]{0}', space=sflag, size = 0x4, scoped, tag = 'scoped memory for tpu_custom_call.1']
    #allocation4 [shape = 's32[1]{0}', space=sflag, size = 0x4, scoped, tag = 'scoped memory for tpu_custom_call.1']
    #allocation5 [shape = 'u8[65536]{0}', space=vmem, size = 0x10000, scoped, tag = 'input window, operand 1, single buffered']
    #allocation6 [shape = 's32[1]{0}', space=sflag, size = 0x4, scoped, tag = 'scoped memory for tpu_custom_call.1']
    #allocation7 [shape = 'u8[65536]{0}', space=vmem, size = 0x10000, scoped, tag = 'input window, operand 4, single buffered']
    #allocation8 [shape = 'u8[65536]{0}', space=vmem, size = 0x10000, scoped, tag = 'input window, operand 7, single buffered']
    #allocation9 [shape = 's32[1]{0}', space=sflag, size = 0x4, scoped, tag = 'scoped memory for tpu_custom_call.1']
    #allocation10 [shape = 'u8[4096]{0}', space=vmem, size = 0x1000, scoped, tag = 'output window, operand 0, single buffered']
    %14 = vsyncpa [#allocation3], 0
    %15 = vsyncpa [#allocation6], 0
    %16 = vsyncpa [#allocation9], 0
    %17 = vsyncpa [#allocation4], 0
    // Predicated region
    $region2: #{tpu_custom_call.1} parent=1 // pred_check
      _
    $region3: #{tpu_custom_call.1} parent=1 // pred_check_branch
      %19 = sbr.rel (0) target = $region5
    $region4: #{tpu_custom_call.1} parent=1 // pred_region
      %s21 = ssub.s32 128, 128
      %22 = vsyncadd [#allocation3], %s21
      %s24 = sshll.u32 [#allocation2], 4
      %s25 = int_to_ptr.vmem [resolvable:$true] %s24
      %27 = dma.hbm_to_vmem [thread:$0]  %s0, 128, %s25, [#allocation3]
    $region5: #{tpu_custom_call.1} parent=1 // pred_fallthru
      _
    // Predicated region
    $region6: #{tpu_custom_call.1} parent=1 // pred_check
      _
    $region7: #{tpu_custom_call.1} parent=1 // pred_check_branch
      %29 = sbr.rel (0) target = $region9
    $region8: #{tpu_custom_call.1} parent=1 // pred_region
      %s31 = ssub.s32 2048, 2048
      %32 = vsyncadd [#allocation6], %s31
      %s33 = sshll.u32 [#allocation5], 4
      %s34 = int_to_ptr.vmem [resolvable:$true] %s33
      %39 = dma.hbm_to_vmem [thread:$0]  %s1, 2048, %s34, [#allocation6], 128, 128, 8
    $region9: #{tpu_custom_call.1} parent=1 // pred_fallthru
      _
    // Predicated region
    $region10: #{tpu_custom_call.1} parent=1 // pred_check
      _
    $region11: #{tpu_custom_call.1} parent=1 // pred_check_branch
      %41 = sbr.rel (0) target = $region13
    $region12: #{tpu_custom_call.1} parent=1 // pred_region
      _
    $region13: #{tpu_custom_call.1} parent=1 // pred_fallthru
      _
    // Predicated region
    $region14: #{tpu_custom_call.1} parent=1 // pred_check
      _
    $region15: #{tpu_custom_call.1} parent=1 // pred_check_branch
      %43 = sbr.rel (0) target = $region17
    $region16: #{tpu_custom_call.1} parent=1 // pred_region
      _
    $region17: #{tpu_custom_call.1} parent=1 // pred_fallthru
      _
    // Predicated region
    $region18: #{tpu_custom_call.1} parent=1 // pred_check
      _
    $region19: #{tpu_custom_call.1} parent=1 // pred_check_branch
      %45 = sbr.rel (0) target = $region21
    $region20: #{tpu_custom_call.1} parent=1 // pred_region
      %s47 = ssub.s32 2048, 2048
      %48 = vsyncadd [#allocation6], %s47
      %s49 = sshll.u32 [#allocation7], 4
      %s50 = int_to_ptr.vmem [resolvable:$true] %s49
      %55 = dma.hbm_to_vmem [thread:$0]  %s4, 2048, %s50, [#allocation6], 128, 128, 8
    $region21: #{tpu_custom_call.1} parent=1 // pred_fallthru
      _
    // Predicated region
    $region22: #{tpu_custom_call.1} parent=1 // pred_check
      _
    $region23: #{tpu_custom_call.1} parent=1 // pred_check_branch
      %57 = sbr.rel (0) target = $region25
    $region24: #{tpu_custom_call.1} parent=1 // pred_region
      _
    $region25: #{tpu_custom_call.1} parent=1 // pred_fallthru
      _
    // Predicated region
    $region26: #{tpu_custom_call.1} parent=1 // pred_check
      _
    $region27: #{tpu_custom_call.1} parent=1 // pred_check_branch
      %59 = sbr.rel (0) target = $region29
    $region28: #{tpu_custom_call.1} parent=1 // pred_region
      _
    $region29: #{tpu_custom_call.1} parent=1 // pred_fallthru
      _
    // Predicated region
    $region30: #{tpu_custom_call.1} parent=1 // pred_check
      _
    $region31: #{tpu_custom_call.1} parent=1 // pred_check_branch
      %61 = sbr.rel (0) target = $region33
    $region32: #{tpu_custom_call.1} parent=1 // pred_region
      %s63 = ssub.s32 2048, 2048
      %64 = vsyncadd [#allocation9], %s63
      %s65 = sshll.u32 [#allocation8], 4
      %s66 = int_to_ptr.vmem [resolvable:$true] %s65
      %71 = dma.hbm_to_vmem [thread:$0]  %s7, 2048, %s66, [#allocation9], 128, 128, 8
    $region33: #{tpu_custom_call.1} parent=1 // pred_fallthru
      _
    // Predicated region
    $region34: #{tpu_custom_call.1} parent=1 // pred_check
      _
    $region35: #{tpu_custom_call.1} parent=1 // pred_check_branch
      %73 = sbr.rel (0) target = $region37
    $region36: #{tpu_custom_call.1} parent=1 // pred_region
      _
    $region37: #{tpu_custom_call.1} parent=1 // pred_fallthru
      _
    // Predicated region
    $region38: #{tpu_custom_call.1} parent=1 // pred_check
      _
    $region39: #{tpu_custom_call.1} parent=1 // pred_check_branch
      %75 = sbr.rel (0) target = $region41
    $region40: #{tpu_custom_call.1} parent=1 // pred_region
      %76 = dma.done [#allocation3], 128
    $region41: #{tpu_custom_call.1} parent=1 // pred_fallthru
      _
    // Predicated region
    $region42: #{tpu_custom_call.1} parent=1 // pred_check
      _
    $region43: #{tpu_custom_call.1} parent=1 // pred_check_branch
      %78 = sbr.rel (0) target = $region45
    $region44: #{tpu_custom_call.1} parent=1 // pred_region
      %79 = dma.done [#allocation6], 2048
    $region45: #{tpu_custom_call.1} parent=1 // pred_fallthru
      _
    // Predicated region
    $region46: #{tpu_custom_call.1} parent=1 // pred_check
      _
    $region47: #{tpu_custom_call.1} parent=1 // pred_check_branch
      %81 = sbr.rel (0) target = $region49
    $region48: #{tpu_custom_call.1} parent=1 // pred_region
      %82 = dma.done [#allocation6], 2048
    $region49: #{tpu_custom_call.1} parent=1 // pred_fallthru
      _
    // Predicated region
    $region50: #{tpu_custom_call.1} parent=1 // pred_check
      _
    $region51: #{tpu_custom_call.1} parent=1 // pred_check_branch
      %84 = sbr.rel (0) target = $region53
    $region52: #{tpu_custom_call.1} parent=1 // pred_region
      %85 = dma.done [#allocation9], 2048
    $region53: #{tpu_custom_call.1} parent=1 // pred_fallthru
      _
    %v86 = vld [vmem:[#allocation2] sm:$0xff]
    %v87 = vlaneseq
    %v88 = vshrl.u32 %v87, 7
    %vm89 = vcmp.lt.s32.totalorder %v88, 8
    %v90 = vld [vmem:[#allocation5] sm:$0xff]
    %v91 = vld [vmem:[#allocation5 + $0x8] sm:$0xff]
    %v92 = vld [vmem:[#allocation5 + $0x10] sm:$0xff]
    %v93 = vld [vmem:[#allocation5 + $0x18] sm:$0xff]
    %v94 = vld [vmem:[#allocation5 + $0x20] sm:$0xff]
    %v95 = vld [vmem:[#allocation5 + $0x28] sm:$0xff]
    %v96 = vld [vmem:[#allocation5 + $0x30] sm:$0xff]
    %v97 = vld [vmem:[#allocation5 + $0x38] sm:$0xff]
    %v98 = vld [vmem:[#allocation5 + $0x40] sm:$0xff]
    %v99 = vld [vmem:[#allocation5 + $0x48] sm:$0xff]
    %v100 = vld [vmem:[#allocation5 + $0x50] sm:$0xff]
    %v101 = vld [vmem:[#allocation5 + $0x58] sm:$0xff]
    %v102 = vld [vmem:[#allocation5 + $0x60] sm:$0xff]
    %v103 = vld [vmem:[#allocation5 + $0x68] sm:$0xff]
    %v104 = vld [vmem:[#allocation5 + $0x70] sm:$0xff]
    %v105 = vld [vmem:[#allocation5 + $0x78] sm:$0xff]
    %v106 = vld [vmem:[%s2] sm:$0x1]
    %v107 = vld [vmem:[%s3] sm:$0x1]
    %108 = vmatprep.subr.mxu0 0.0
    %109 = vmatpush1.msra.mxu0 %v90
    %110 = vmatprep.subr.mxu0 0.0
    %111 = vmatpush1.msra.mxu0 %v91
    %112 = vmatprep.subr.mxu0 0.0
    %113 = vmatpush1.msra.mxu0 %v92
    %114 = vmatprep.subr.mxu0 0.0
    %115 = vmatpush1.msra.mxu0 %v93
    %116 = vmatprep.subr.mxu0 0.0
    %117 = vmatpush1.msra.mxu0 %v94
    %118 = vmatprep.subr.mxu0 0.0
    %119 = vmatpush1.msra.mxu0 %v95
    %120 = vmatprep.subr.mxu0 0.0
    %121 = vmatpush1.msra.mxu0 %v96
    %122 = vmatprep.subr.mxu0 0.0
    %123 = vmatpush1.msra.mxu0 %v97
    %124 = vmatprep.subr.mxu0 0.0
    %125 = vmatpush1.msra.mxu0 %v98
    %126 = vmatprep.subr.mxu0 0.0
    %127 = vmatpush1.msra.mxu0 %v99
    %128 = vmatprep.subr.mxu0 0.0
    %129 = vmatpush1.msra.mxu0 %v100
    %130 = vmatprep.subr.mxu0 0.0
    %131 = vmatpush1.msra.mxu0 %v101
    %132 = vmatprep.subr.mxu0 0.0
    %133 = vmatpush1.msra.mxu0 %v102
    %134 = vmatprep.subr.mxu0 0.0
    %135 = vmatpush1.msra.mxu0 %v103
    %136 = vmatprep.subr.mxu0 0.0
    %137 = vmatpush1.msra.mxu0 %v104
    %138 = vmatprep.subr.mxu0 0.0
    %139 = vmatpush1.msra.mxu0 %v105
    %140 = vmatprep.subr.mxu0 0.0
    %141 = vmatpush1.msra.mxu0 0.0
    %142 = vmatprep.subr.mxu0 0.0
    %143 = vmatpush1.msra.mxu0 0.0
    %144 = vmatprep.subr.mxu0 0.0
    %145 = vmatpush1.msra.mxu0 0.0
    %146 = vmatprep.subr.mxu0 0.0
    %147 = vmatpush1.msra.mxu0 0.0
    %148 = vmatprep.subr.mxu0 0.0
    %149 = vmatpush1.msra.mxu0 0.0
    %150 = vmatprep.subr.mxu0 0.0
    %151 = vmatpush1.msra.mxu0 0.0
    %152 = vmatprep.subr.mxu0 0.0
    %153 = vmatpush1.msra.mxu0 0.0
    %154 = vmatprep.subr.mxu0 0.0
    %155 = vmatpush1.msra.mxu0 0.0
    %156 = vmatprep.subr.mxu0 0.0
    %157 = vmatpush1.msra.mxu0 0.0
    %158 = vmatprep.subr.mxu0 0.0
    %159 = vmatpush1.msra.mxu0 0.0
    %160 = vmatprep.subr.mxu0 0.0
    %161 = vmatpush1.msra.mxu0 0.0
    %162 = vmatprep.subr.mxu0 0.0
    %163 = vmatpush1.msra.mxu0 0.0
    %164 = vmatprep.subr.mxu0 0.0
    %165 = vmatpush1.msra.mxu0 0.0
    %166 = vmatprep.subr.mxu0 0.0
    %167 = vmatpush1.msra.mxu0 0.0
    %168 = vmatprep.subr.mxu0 0.0
    %169 = vmatpush1.msra.mxu0 0.0
    %170 = vmatprep.subr.mxu0 0.0
    %171 = vmatpush1.msra.mxu0 0.0
    %172 = vmatprep.mubr.f32.mxu0 0.0
    %173 = vmatmul.mubr.f32.gmra.mrb[0].mxu0 %v86
    %v174 = vpop.f32.mrb[0].mxu0
    %v175 = vadd.f32 0.0, %v174
    %v176 = vpop.f32.mrb[0].mxu0
    %177 = vdwg.mxu0
    %v178 = vsel %vm89, 1, 0
    %vm179 = vcmp.eq.s32.totalorder %v178, 1
    %v180 = vsel %vm179, %v175, 0.0
    %v181 = vrot.slane %v180, 4
    %v182 = vadd.f32 %v180, %v181
    %v183 = vrot.slane %v182, 2
    %v184 = vadd.f32 %v182, %v183
    %v185 = vrot.slane %v184, 1
    %v186 = vadd.f32 %v184, %v185
    %v187 = vmul.f32 %v186, 0.125
    %v188 = vsub.f32 %v175, %v187
    %v189 = vsel %vm179, %v188, 0.0
    %v190 = vmul.f32 %v189, %v189
    %v191 = vrot.slane %v190, 4
    %v192 = vadd.f32 %v190, %v191
    %v193 = vrot.slane %v192, 2
    %v194 = vadd.f32 %v192, %v193
    %v195 = vrot.slane %v194, 1
    %v196 = vadd.f32 %v194, %v195
    %v197 = vmul.f32 %v196, 0.125
    %v198 = vadd.f32 %v197, 1e-05
    %v199 = vrsqrt.pop %v198
    %v200 = vmul.f32 %v188, %v199
    %v202 = vlaneseq
    %v203 = vshrl.u32 %v202, 7
    %v204 = vsub.s32 0, %v203
    %v205 = vrot.slane %v106, %v204
    %v207 = vmul.f32 %v200, %v205
    %v209 = vlaneseq
    %v210 = vshrl.u32 %v209, 7
    %v211 = vsub.s32 0, %v210
    %v212 = vrot.slane %v107, %v211
    %v214 = vadd.f32 %v207, %v212
    %v215 = vtanh.pop %v214
    %v216 = vld [vmem:[#allocation7] sm:$0xff]
    %v217 = vld [vmem:[#allocation7 + $0x8] sm:$0xff]
    %v218 = vld [vmem:[#allocation7 + $0x10] sm:$0xff]
    %v219 = vld [vmem:[#allocation7 + $0x18] sm:$0xff]
    %v220 = vld [vmem:[#allocation7 + $0x20] sm:$0xff]
    %v221 = vld [vmem:[#allocation7 + $0x28] sm:$0xff]
    %v222 = vld [vmem:[#allocation7 + $0x30] sm:$0xff]
    %v223 = vld [vmem:[#allocation7 + $0x38] sm:$0xff]
    %v224 = vld [vmem:[#allocation7 + $0x40] sm:$0xff]
    %v225 = vld [vmem:[#allocation7 + $0x48] sm:$0xff]
    %v226 = vld [vmem:[#allocation7 + $0x50] sm:$0xff]
    %v227 = vld [vmem:[#allocation7 + $0x58] sm:$0xff]
    %v228 = vld [vmem:[#allocation7 + $0x60] sm:$0xff]
    %v229 = vld [vmem:[#allocation7 + $0x68] sm:$0xff]
    %v230 = vld [vmem:[#allocation7 + $0x70] sm:$0xff]
    %v231 = vld [vmem:[#allocation7 + $0x78] sm:$0xff]
    %v232 = vld [vmem:[%s5] sm:$0x1]
    %v233 = vld [vmem:[%s6] sm:$0x1]
    %234 = vmatprep.subr.mxu0 0.0
    %235 = vmatpush1.msra.mxu0 %v216
    %236 = vmatprep.subr.mxu0 0.0
    %237 = vmatpush1.msra.mxu0 %v217
    %238 = vmatprep.subr.mxu0 0.0
    %239 = vmatpush1.msra.mxu0 %v218
    %240 = vmatprep.subr.mxu0 0.0
    %241 = vmatpush1.msra.mxu0 %v219
    %242 = vmatprep.subr.mxu0 0.0
    %243 = vmatpush1.msra.mxu0 %v220
    %244 = vmatprep.subr.mxu0 0.0
    %245 = vmatpush1.msra.mxu0 %v221
    %246 = vmatprep.subr.mxu0 0.0
    %247 = vmatpush1.msra.mxu0 %v222
    %248 = vmatprep.subr.mxu0 0.0
    %249 = vmatpush1.msra.mxu0 %v223
    %250 = vmatprep.subr.mxu0 0.0
    %251 = vmatpush1.msra.mxu0 %v224
    %252 = vmatprep.subr.mxu0 0.0
    %253 = vmatpush1.msra.mxu0 %v225
    %254 = vmatprep.subr.mxu0 0.0
    %255 = vmatpush1.msra.mxu0 %v226
    %256 = vmatprep.subr.mxu0 0.0
    %257 = vmatpush1.msra.mxu0 %v227
    %258 = vmatprep.subr.mxu0 0.0
    %259 = vmatpush1.msra.mxu0 %v228
    %260 = vmatprep.subr.mxu0 0.0
    %261 = vmatpush1.msra.mxu0 %v229
    %262 = vmatprep.subr.mxu0 0.0
    %263 = vmatpush1.msra.mxu0 %v230
    %264 = vmatprep.subr.mxu0 0.0
    %265 = vmatpush1.msra.mxu0 %v231
    %266 = vmatprep.subr.mxu0 0.0
    %267 = vmatpush1.msra.mxu0 0.0
    %268 = vmatprep.subr.mxu0 0.0
    %269 = vmatpush1.msra.mxu0 0.0
    %270 = vmatprep.subr.mxu0 0.0
    %271 = vmatpush1.msra.mxu0 0.0
    %272 = vmatprep.subr.mxu0 0.0
    %273 = vmatpush1.msra.mxu0 0.0
    %274 = vmatprep.subr.mxu0 0.0
    %275 = vmatpush1.msra.mxu0 0.0
    %276 = vmatprep.subr.mxu0 0.0
    %277 = vmatpush1.msra.mxu0 0.0
    %278 = vmatprep.subr.mxu0 0.0
    %279 = vmatpush1.msra.mxu0 0.0
    %280 = vmatprep.subr.mxu0 0.0
    %281 = vmatpush1.msra.mxu0 0.0
    %282 = vmatprep.subr.mxu0 0.0
    %283 = vmatpush1.msra.mxu0 0.0
    %284 = vmatprep.subr.mxu0 0.0
    %285 = vmatpush1.msra.mxu0 0.0
    %286 = vmatprep.subr.mxu0 0.0
    %287 = vmatpush1.msra.mxu0 0.0
    %288 = vmatprep.subr.mxu0 0.0
    %289 = vmatpush1.msra.mxu0 0.0
    %290 = vmatprep.subr.mxu0 0.0
    %291 = vmatpush1.msra.mxu0 0.0
    %292 = vmatprep.subr.mxu0 0.0
    %293 = vmatpush1.msra.mxu0 0.0
    %294 = vmatprep.subr.mxu0 0.0
    %295 = vmatpush1.msra.mxu0 0.0
    %296 = vmatprep.subr.mxu0 0.0
    %297 = vmatpush1.msra.mxu0 0.0
    %298 = vmatprep.mubr.f32.mxu0 0.0
    %299 = vmatmul.mubr.f32.gmra.mrb[0].mxu0 %v215
    %v300 = vpop.f32.mrb[0].mxu0
    %v301 = vadd.f32 0.0, %v300
    %v302 = vpop.f32.mrb[0].mxu0
    %303 = vdwg.mxu0
    %v304 = vsel %vm179, %v301, 0.0
    %v305 = vrot.slane %v304, 4
    %v306 = vadd.f32 %v304, %v305
    %v307 = vrot.slane %v306, 2
    %v308 = vadd.f32 %v306, %v307
    %v309 = vrot.slane %v308, 1
    %v310 = vadd.f32 %v308, %v309
    %v311 = vmul.f32 %v310, 0.125
    %v312 = vsub.f32 %v301, %v311
    %v313 = vsel %vm179, %v312, 0.0
    %v314 = vmul.f32 %v313, %v313
    %v315 = vrot.slane %v314, 4
    %v316 = vadd.f32 %v314, %v315
    %v317 = vrot.slane %v316, 2
    %v318 = vadd.f32 %v316, %v317
    %v319 = vrot.slane %v318, 1
    %v320 = vadd.f32 %v318, %v319
    %v321 = vmul.f32 %v320, 0.125
    %v322 = vadd.f32 %v321, 1e-05
    %v323 = vrsqrt.pop %v322
    %v324 = vmul.f32 %v312, %v323
    %v326 = vlaneseq
    %v327 = vshrl.u32 %v326, 7
    %v328 = vsub.s32 0, %v327
    %v329 = vrot.slane %v232, %v328
    %v331 = vmul.f32 %v324, %v329
    %v333 = vlaneseq
    %v334 = vshrl.u32 %v333, 7
    %v335 = vsub.s32 0, %v334
    %v336 = vrot.slane %v233, %v335
    %v338 = vadd.f32 %v331, %v336
    %v339 = vtanh.pop %v338
    %v340 = vld [vmem:[#allocation8] sm:$0xff]
    %v341 = vld [vmem:[#allocation8 + $0x8] sm:$0xff]
    %v342 = vld [vmem:[#allocation8 + $0x10] sm:$0xff]
    %v343 = vld [vmem:[#allocation8 + $0x18] sm:$0xff]
    %v344 = vld [vmem:[#allocation8 + $0x20] sm:$0xff]
    %v345 = vld [vmem:[#allocation8 + $0x28] sm:$0xff]
    %v346 = vld [vmem:[#allocation8 + $0x30] sm:$0xff]
    %v347 = vld [vmem:[#allocation8 + $0x38] sm:$0xff]
    %v348 = vld [vmem:[#allocation8 + $0x40] sm:$0xff]
    %v349 = vld [vmem:[#allocation8 + $0x48] sm:$0xff]
    %v350 = vld [vmem:[#allocation8 + $0x50] sm:$0xff]
    %v351 = vld [vmem:[#allocation8 + $0x58] sm:$0xff]
    %v352 = vld [vmem:[#allocation8 + $0x60] sm:$0xff]
    %v353 = vld [vmem:[#allocation8 + $0x68] sm:$0xff]
    %v354 = vld [vmem:[#allocation8 + $0x70] sm:$0xff]
    %v355 = vld [vmem:[#allocation8 + $0x78] sm:$0xff]
    %v356 = vld [vmem:[%s8] sm:$0x1]
    %v358 = vlaneseq
    %v359 = vshrl.u32 %v358, 7
    %v360 = vsub.s32 0, %v359
    %v361 = vrot.slane %v356, %v360
    %363 = vmatprep.subr.mxu0 0.0
    %364 = vmatpush1.msra.mxu0 %v340
    %365 = vmatprep.subr.mxu0 0.0
    %366 = vmatpush1.msra.mxu0 %v341
    %367 = vmatprep.subr.mxu0 0.0
    %368 = vmatpush1.msra.mxu0 %v342
    %369 = vmatprep.subr.mxu0 0.0
    %370 = vmatpush1.msra.mxu0 %v343
    %371 = vmatprep.subr.mxu0 0.0
    %372 = vmatpush1.msra.mxu0 %v344
    %373 = vmatprep.subr.mxu0 0.0
    %374 = vmatpush1.msra.mxu0 %v345
    %375 = vmatprep.subr.mxu0 0.0
    %376 = vmatpush1.msra.mxu0 %v346
    %377 = vmatprep.subr.mxu0 0.0
    %378 = vmatpush1.msra.mxu0 %v347
    %379 = vmatprep.subr.mxu0 0.0
    %380 = vmatpush1.msra.mxu0 %v348
    %381 = vmatprep.subr.mxu0 0.0
    %382 = vmatpush1.msra.mxu0 %v349
    %383 = vmatprep.subr.mxu0 0.0
    %384 = vmatpush1.msra.mxu0 %v350
    %385 = vmatprep.subr.mxu0 0.0
    %386 = vmatpush1.msra.mxu0 %v351
    %387 = vmatprep.subr.mxu0 0.0
    %388 = vmatpush1.msra.mxu0 %v352
    %389 = vmatprep.subr.mxu0 0.0
    %390 = vmatpush1.msra.mxu0 %v353
    %391 = vmatprep.subr.mxu0 0.0
    %392 = vmatpush1.msra.mxu0 %v354
    %393 = vmatprep.subr.mxu0 0.0
    %394 = vmatpush1.msra.mxu0 %v355
    %395 = vmatprep.subr.mxu0 0.0
    %396 = vmatpush1.msra.mxu0 0.0
    %397 = vmatprep.subr.mxu0 0.0
    %398 = vmatpush1.msra.mxu0 0.0
    %399 = vmatprep.subr.mxu0 0.0
    %400 = vmatpush1.msra.mxu0 0.0
    %401 = vmatprep.subr.mxu0 0.0
    %402 = vmatpush1.msra.mxu0 0.0
    %403 = vmatprep.subr.mxu0 0.0
    %404 = vmatpush1.msra.mxu0 0.0
    %405 = vmatprep.subr.mxu0 0.0
    %406 = vmatpush1.msra.mxu0 0.0
    %407 = vmatprep.subr.mxu0 0.0
    %408 = vmatpush1.msra.mxu0 0.0
    %409 = vmatprep.subr.mxu0 0.0
    %410 = vmatpush1.msra.mxu0 0.0
    %411 = vmatprep.subr.mxu0 0.0
    %412 = vmatpush1.msra.mxu0 0.0
    %413 = vmatprep.subr.mxu0 0.0
    %414 = vmatpush1.msra.mxu0 0.0
    %415 = vmatprep.subr.mxu0 0.0
    %416 = vmatpush1.msra.mxu0 0.0
    %417 = vmatprep.subr.mxu0 0.0
    %418 = vmatpush1.msra.mxu0 0.0
    %419 = vmatprep.subr.mxu0 0.0
    %420 = vmatpush1.msra.mxu0 0.0
    %421 = vmatprep.subr.mxu0 0.0
    %422 = vmatpush1.msra.mxu0 0.0
    %423 = vmatprep.subr.mxu0 0.0
    %424 = vmatpush1.msra.mxu0 0.0
    %425 = vmatprep.subr.mxu0 0.0
    %426 = vmatpush1.msra.mxu0 0.0
    %427 = vmatprep.mubr.f32.mxu0 0.0
    %428 = vmatmul.mubr.f32.gmra.mrb[0].mxu0 %v339
    %v429 = vpop.f32.mrb[0].mxu0
    %v430 = vadd.f32 %v361, %v429
    %v431 = vpop.f32.mrb[0].mxu0
    %432 = vdwg.mxu0
    %433 = vst [vmem:[#allocation10] sm:$0xff] %v430
    // Predicated region
    $region54: #{tpu_custom_call.1} parent=1 // pred_check
      _
    $region55: #{tpu_custom_call.1} parent=1 // pred_check_branch
      %435 = sbr.rel (0) target = $region57
    $region56: #{tpu_custom_call.1} parent=1 // pred_region
      %s437 = ssub.s32 128, 128
      %438 = vsyncadd [#allocation4], %s437
      %s440 = sshll.u32 [#allocation10], 4
      %s441 = int_to_ptr.vmem [resolvable:$true] %s440
      %443 = dma.vmem_to_hbm [thread:$0]  %s441, 128, %s9, [#allocation4]
    $region57: #{tpu_custom_call.1} parent=1 // pred_fallthru
      _
    // Predicated region
    $region58: #{tpu_custom_call.1} parent=1 // pred_check
      _
    $region59: #{tpu_custom_call.1} parent=1 // pred_check_branch
      %445 = sbr.rel (0) target = $region61
    $region60: #{tpu_custom_call.1} parent=1 // pred_region
      %446 = dma.done [#allocation4], 128
    $region61: #{tpu_custom_call.1} parent=1 // pred_fallthru
      _
    %447 = vsyncpa [#allocation3], 1
    %448 = vsyncpa [#allocation6], 1
    %449 = vsyncpa [#allocation9], 1
    %450 = vsyncpa [#allocation4], 1

</llo_original>
